<compile_context>
chip_gen: v6e
topology: v6e:2x2x1
jax: 0.10.0
libtpu: 0.0.40
codegen_flags: <defaults>
</compile_context>

<pallas_src>
import math

import jax
import jax.numpy as jnp
from jax.experimental import pallas as pl
from jax.experimental.pallas import tpu as pltpu


def _sdpa_kernel(q_ref, k_ref, v_ref, mask_ref, ctx_ref, attn_ref):
    # q_ref:       (hb, tq, Dk)
    # k_ref/v_ref: (hb, S, Dk)
    # mask_ref:    (hbm, tqm, Km) with hbm in {1,hb}, tqm in {1,tq}, Km in {1,S};
    #              bool or integer, nonzero/True == masked out.
    # ctx_ref:     (hb, tq, Dk)
    # attn_ref:    (hb, tq, S)
    d_k = q_ref.shape[-1]
    scale = 1.0 / math.sqrt(d_k)

    # Fold the softmax scale into the small Q tile (native dtype), not the (tq,S) scores.
    q = q_ref[...] * scale
    k = k_ref[...]
    v = v_ref[...]

    # scores = (Q / sqrt(Dk)) @ K^T per head: contract last dims of both operands
    # (no explicit K transpose through the XLU); f32 accumulation on the MXU.
    scores = jnp.einsum("hqd,hkd->hqk", q, k, preferred_element_type=jnp.float32)

    # masked_fill_(attn_mask, -1e9). The compact mask tile broadcasts over
    # heads / query rows / keys as needed.
    mask = mask_ref[...]
    if mask.dtype != jnp.bool_:
        mask = mask != 0
    scores = jnp.where(mask, jnp.float32(-1e9), scores)

    # Numerically stable softmax along keys.
    m = jnp.max(scores, axis=-1, keepdims=True)
    e = jnp.exp(scores - m)
    denom = jnp.sum(e, axis=-1, keepdims=True)
    # denom is only (hb, tq, 1); exact reciprocal keeps low-order bits close to torch.
    attn = e * pl.reciprocal(denom, approx=False)

    # context = attn @ V per head with f32 accumulation on the MXU.
    ctx = jnp.einsum("hqk,hkd->hqd", attn.astype(v.dtype), v,
                     preferred_element_type=jnp.float32)

    attn_ref[...] = attn.astype(attn_ref.dtype)
    ctx_ref[...] = ctx.astype(ctx_ref.dtype)


def scaled_dot_product_attention(Q, K, V, attn_mask, *, attn_dtype=None):
    """Q, K, V: [B, H, S, Dk]; attn_mask: 4-D, each dim 1 or full (broadcastable to
    [B, H, S, S]), bool/int with nonzero == masked.

    Returns (context [B,H,S,Dk] in Q.dtype, attn [B,H,S,S] in attn_dtype
    (default Q.dtype, matching torch's softmax-output dtype)).
    """
    B, H, S, Dk = Q.shape
    assert K.shape == (B, H, S, Dk) and V.shape == (B, H, S, Dk)
    assert attn_mask.ndim == 4, "attn_mask must be 4-D (dims of size 1 broadcast)"
    Bm, Hm, Qm, Km = attn_mask.shape
    assert Bm in (1, B) and Hm in (1, H) and Qm in (1, S) and Km in (1, S)

    attn_dtype = Q.dtype if attn_dtype is None else jnp.dtype(attn_dtype)

    q_isz = jnp.dtype(Q.dtype).itemsize
    kv_isz = jnp.dtype(K.dtype).itemsize
    mask_isz = jnp.dtype(attn_mask.dtype).itemsize
    attn_isz = jnp.dtype(attn_dtype).itemsize
    ctx_isz = q_isz

    # ---- VMEM-aware tile selection (q tile + head blocking) ----
    def vmem_est(hb, tq):
        m_h = hb if Hm == H else 1
        m_q = tq if Qm == S else 1
        m_k = S if Km == S else 1
        blocks = (hb * tq * Dk * q_isz            # Q in
                  + 2 * hb * S * Dk * kv_isz      # K + V in (resident per (b, hblk))
                  + m_h * m_q * m_k * mask_isz    # mask in
                  + hb * tq * Dk * ctx_isz        # ctx out
                  + hb * tq * S * attn_isz)       # attn out
        temps = 3 * hb * tq * S * 4               # scores / e / attn f32 live values
        return 2 * blocks + temps                 # x2: double-buffered pipeline

    budget = 20 * 1024 * 1024                     # safe on v5e/v6e/v7x scoped VMEM
    candidates = [t for t in (512, 256, 128, 64, 32, 16, 8) if S % t == 0]
    tq = None
    for t in candidates:                          # biggest q tile that fits the budget
        if vmem_est(1, t) <= budget:
            tq = t
            break
    if tq is None:
        # TODO(synk): ragged S (no divisor that is a multiple of 8) — one full-length q tile.
        tq = candidates[-1] if candidates else S

    hb = 1
    for h in (4, 2):                              # block heads to cut grid-step count
        if H % h == 0 and vmem_est(h, tq) <= budget:
            hb = h
            break

    nq = S // tq
    est = vmem_est(hb, tq)
    vmem_limit = int(min(48 * 1024 * 1024, max(16 * 1024 * 1024, 2 * est)))

    # ---- BlockSpecs ----
    def qkv_index(b, h, i):
        return (b, h, i, 0)

    def kv_index(b, h, i):
        return (b, h, 0, 0)          # constant across q axis -> K/V stay resident

    def mask_index(b, h, i):
        return (b if Bm == B else 0,
                h if Hm == H else 0,
                i if Qm == S else 0,
                0)

    q_spec = pl.BlockSpec((pl.Squeezed(), hb, tq, Dk), qkv_index)
    kv_spec = pl.BlockSpec((pl.Squeezed(), hb, S, Dk), kv_index)
    mask_spec = pl.BlockSpec(
        (pl.Squeezed(), hb if Hm == H else 1, tq if Qm == S else 1, Km),
        mask_index)
    ctx_spec = pl.BlockSpec((pl.Squeezed(), hb, tq, Dk), qkv_index)
    attn_spec = pl.BlockSpec((pl.Squeezed(), hb, tq, S), qkv_index)

    cost = pl.CostEstimate(
        flops=int(4 * B * H * S * S * Dk),               # QK^T + attn@V
        transcendentals=int(B * H * S * S),              # exp
        bytes_accessed=int(
            B * H * S * Dk * (q_isz + 2 * kv_isz + ctx_isz)   # Q, K, V in + ctx out
            + attn_mask.size * mask_isz                       # mask in (compact form)
            + B * H * S * S * attn_isz                        # attn out
        ),
    )

    ctx, attn = pl.pallas_call(
        _sdpa_kernel,
        out_shape=(
            jax.ShapeDtypeStruct((B, H, S, Dk), Q.dtype),
            jax.ShapeDtypeStruct((B, H, S, S), attn_dtype),
        ),
        grid_spec=pltpu.PrefetchScalarGridSpec(
            num_scalar_prefetch=0,
            grid=(B, H // hb, nq),
            in_specs=[q_spec, kv_spec, kv_spec, mask_spec],
            out_specs=[ctx_spec, attn_spec],
        ),
        compiler_params=pltpu.CompilerParams(
            # q axis "arbitrary": megacore / dual-TC split stays on (B, head-block)
            # so the resident K/V fetch is not duplicated per core.
            dimension_semantics=("parallel", "parallel", "arbitrary"),
            vmem_limit_bytes=vmem_limit,
        ),
        cost_estimate=cost,
    )(Q, K, V, attn_mask)
    return ctx, attn


def _reference(Q, K, V, attn_mask):
    d_k = Q.shape[-1]
    scores = jnp.einsum("bhqd,bhkd->bhqk",
                        Q.astype(jnp.float32), K.astype(jnp.float32))
    scores = scores / jnp.sqrt(jnp.float32(d_k))
    scores = jnp.where(attn_mask != 0, -1e9, scores)
    attn = jax.nn.softmax(scores, axis=-1)
    ctx = jnp.einsum("bhqk,bhkd->bhqd", attn, V.astype(jnp.float32))
    return ctx, attn


if __name__ == "__main__":
    # Small shapes consistent with the BERT-style attention module.
    B, H, S, d_k = 2, 2, 8, 32

    key = jax.random.PRNGKey(0)
    kq, kk, kv = jax.random.split(key, 3)
    Q = jax.random.normal(kq, (B, H, S, d_k), dtype=jnp.float32)
    K = jax.random.normal(kk, (B, H, S, d_k), dtype=jnp.float32)
    V = jax.random.normal(kv, (B, H, S, d_k), dtype=jnp.float32)

    # Padding-style mask: last 2 key positions masked out for every query (True == masked).
    key_pad = jnp.arange(S) >= (S - 2)                                   # [S] bool

    # (1) Module contract: full [B, H, S, S] boolean mask, fed as-is (no wrapper cast pass).
    full_mask = jnp.broadcast_to(key_pad[None, None, None, :], (B, H, S, S))
    ctx, attn = scaled_dot_product_attention(Q, K, V, full_mask)
    jax.block_until_ready((ctx, attn))

    ctx_ref, attn_ref = _reference(Q, K, V, full_mask)
    assert attn.dtype == Q.dtype
    assert jnp.allclose(ctx, ctx_ref, atol=1e-4, rtol=1e-4)
    assert jnp.allclose(attn, attn_ref, atol=1e-4, rtol=1e-4)

    # (2) Compact broadcastable key-padding mask [B, 1, 1, S]: same math, ~H*S x less mask HBM.
    compact_mask = jnp.broadcast_to(key_pad[None, None, None, :], (B, 1, 1, S))
    ctx_c, attn_c = scaled_dot_product_attention(Q, K, V, compact_mask)
    jax.block_until_ready((ctx_c, attn_c))
    assert jnp.allclose(ctx_c, ctx_ref, atol=1e-4, rtol=1e-4)
    assert jnp.allclose(attn_c, attn_ref, atol=1e-4, rtol=1e-4)

    # (3) bf16 inputs -> bf16 attn output (halves the dominant attn HBM stream).
    ctx_b, attn_b = scaled_dot_product_attention(
        Q.astype(jnp.bfloat16), K.astype(jnp.bfloat16), V.astype(jnp.bfloat16),
        compact_mask)
    jax.block_until_ready((ctx_b, attn_b))
    assert attn_b.dtype == jnp.bfloat16
    assert jnp.allclose(ctx_b.astype(jnp.float32), ctx_ref, atol=5e-2, rtol=5e-2)
    assert jnp.allclose(attn_b.astype(jnp.float32), attn_ref, atol=2e-2, rtol=2e-2)

    print("KERNEL_OK")
</pallas_src>

<mosaic_0001>
module attributes {stable_mosaic.version = 11 : i64} {
  func.func @_sdpa_kernel(%arg0: i32, %arg1: i32, %arg2: i32, %arg3: memref<1x2x8x32xf32, #tpu.memory_space<vmem>>, %arg4: memref<1x2x8x32xf32, #tpu.memory_space<vmem>>, %arg5: memref<1x2x8x32xf32, #tpu.memory_space<vmem>>, %arg6: memref<1x2x8x8xi32, #tpu.memory_space<vmem>>, %arg7: memref<1x2x8x32xf32, #tpu.memory_space<vmem>>, %arg8: memref<1x2x8x8xf32, #tpu.memory_space<vmem>>) attributes {dimension_semantics = [#tpu.dimension_semantics<parallel>, #tpu.dimension_semantics<parallel>, #tpu.dimension_semantics<arbitrary>], iteration_bounds = array<i64: 2, 1, 1>, scalar_prefetch = 0 : i64, scratch_operands = 0 : i64, tpu.core_type = #tpu.core_type<tc>, window_params = [{transform_indices = @transform_0, window_bounds = array<i64: 1, 2, 8, 32>}, {transform_indices = @transform_1, window_bounds = array<i64: 1, 2, 8, 32>}, {transform_indices = @transform_2, window_bounds = array<i64: 1, 2, 8, 32>}, {transform_indices = @transform_3, window_bounds = array<i64: 1, 2, 8, 8>}, {transform_indices = @transform_4, window_bounds = array<i64: 1, 2, 8, 32>}, {transform_indices = @transform_5, window_bounds = array<i64: 1, 2, 8, 8>}]} {
    %c0 = arith.constant 0 : index
    %c0_0 = arith.constant 0 : index
    %c0_1 = arith.constant 0 : index
    %c0_2 = arith.constant 0 : index
    %0 = vector.load %arg3[%c0, %c0_0, %c0_1, %c0_2] : memref<1x2x8x32xf32, #tpu.memory_space<vmem>>, vector<1x2x8x32xf32>
    %1 = vector.shape_cast %0 : vector<1x2x8x32xf32> to vector<2x8x32xf32>
    %cst = arith.constant 0.176776692 : f32
    %2 = vector.broadcast %cst : f32 to vector<2x8x32xf32>
    %3 = arith.mulf %1, %2 : vector<2x8x32xf32>
    %c0_3 = arith.constant 0 : index
    %c0_4 = arith.constant 0 : index
    %c0_5 = arith.constant 0 : index
    %c0_6 = arith.constant 0 : index
    %4 = vector.load %arg4[%c0_3, %c0_4, %c0_5, %c0_6] : memref<1x2x8x32xf32, #tpu.memory_space<vmem>>, vector<1x2x8x32xf32>
    %5 = vector.shape_cast %4 : vector<1x2x8x32xf32> to vector<2x8x32xf32>
    %c0_7 = arith.constant 0 : index
    %c0_8 = arith.constant 0 : index
    %c0_9 = arith.constant 0 : index
    %c0_10 = arith.constant 0 : index
    %6 = vector.load %arg5[%c0_7, %c0_8, %c0_9, %c0_10] : memref<1x2x8x32xf32, #tpu.memory_space<vmem>>, vector<1x2x8x32xf32>
    %7 = vector.shape_cast %6 : vector<1x2x8x32xf32> to vector<2x8x32xf32>
    "tpu.trace_start"() <{level = 10 : i32, message = "hqd,hkd->hqk"}> : () -> ()
    %cst_11 = arith.constant dense<0.000000e+00> : vector<2x8x8xf32>
    %8 = tpu.matmul %3, %5, %cst_11 {dimension_numbers = #tpu.dot_dimension_numbers<[2], [2], [1], [1], [0, 0, 0, 1, 1, 1], [0], [0]>} : vector<2x8x32xf32>, vector<2x8x32xf32>, vector<2x8x8xf32> -> vector<2x8x8xf32>
    "tpu.trace_stop"() : () -> ()
    %c0_12 = arith.constant 0 : index
    %c0_13 = arith.constant 0 : index
    %c0_14 = arith.constant 0 : index
    %c0_15 = arith.constant 0 : index
    %9 = vector.load %arg6[%c0_12, %c0_13, %c0_14, %c0_15] : memref<1x2x8x8xi32, #tpu.memory_space<vmem>>, vector<1x2x8x8xi32>
    %10 = vector.shape_cast %9 : vector<1x2x8x8xi32> to vector<2x8x8xi32>
    %cst_16 = arith.constant dense<0> : vector<2x8x8xi32>
    %11 = arith.cmpi ne, %10, %cst_16 : vector<2x8x8xi32>
    %cst_17 = arith.constant -1.000000e+09 : f32
    %12 = vector.broadcast %cst_17 : f32 to vector<2x8x8xf32>
    %13 = arith.select %11, %12, %8 : vector<2x8x8xi1>, vector<2x8x8xf32>
    %cst_18 = arith.constant dense<0xFF800000> : vector<2x8xf32>
    %14 = vector.multi_reduction <maximumf>, %13, %cst_18 [2] : vector<2x8x8xf32> to vector<2x8xf32>
    %15 = vector.shape_cast %14 : vector<2x8xf32> to vector<2x8x1xf32>
    %16 = vector.broadcast %15 : vector<2x8x1xf32> to vector<2x8x8xf32>
    %17 = arith.subf %13, %16 : vector<2x8x8xf32>
    %18 = math.exp %17 : vector<2x8x8xf32>
    %cst_19 = arith.constant dense<0.000000e+00> : vector<2x8xf32>
    %19 = vector.multi_reduction <add>, %18, %cst_19 [2] : vector<2x8x8xf32> to vector<2x8xf32>
    %20 = vector.shape_cast %19 : vector<2x8xf32> to vector<2x8x1xf32>
    %21 = tpu.reciprocal %20 : vector<2x8x1xf32> -> vector<2x8x1xf32>
    %22 = vector.broadcast %21 : vector<2x8x1xf32> to vector<2x8x8xf32>
    %23 = arith.mulf %18, %22 : vector<2x8x8xf32>
    "tpu.trace_start"() <{level = 10 : i32, message = "hqk,hkd->hqd"}> : () -> ()
    %cst_20 = arith.constant dense<0.000000e+00> : vector<2x8x32xf32>
    %24 = tpu.matmul %23, %7, %cst_20 {dimension_numbers = #tpu.dot_dimension_numbers<[2], [1], [1], [2], [0, 0, 0, 1, 1, 2], [0], [0]>} : vector<2x8x8xf32>, vector<2x8x32xf32>, vector<2x8x32xf32> -> vector<2x8x32xf32>
    "tpu.trace_stop"() : () -> ()
    %c0_21 = arith.constant 0 : index
    %c0_22 = arith.constant 0 : index
    %c0_23 = arith.constant 0 : index
    %c0_24 = arith.constant 0 : index
    %25 = vector.load %arg8[%c0_21, %c0_22, %c0_23, %c0_24] : memref<1x2x8x8xf32, #tpu.memory_space<vmem>>, vector<1x2x8x8xf32>
    %26 = vector.shape_cast %25 : vector<1x2x8x8xf32> to vector<2x8x8xf32>
    %27 = vector.shape_cast %23 : vector<2x8x8xf32> to vector<1x2x8x8xf32>
    tpu.vector_store %arg8[%c0_21, %c0_22, %c0_23, %c0_24], %27 {strides = array<i32>} : memref<1x2x8x8xf32, #tpu.memory_space<vmem>>, vector<1x2x8x8xf32>,
    %c0_25 = arith.constant 0 : index
    %c0_26 = arith.constant 0 : index
    %c0_27 = arith.constant 0 : index
    %c0_28 = arith.constant 0 : index
    %28 = vector.load %arg7[%c0_25, %c0_26, %c0_27, %c0_28] : memref<1x2x8x32xf32, #tpu.memory_space<vmem>>, vector<1x2x8x32xf32>
    %29 = vector.shape_cast %28 : vector<1x2x8x32xf32> to vector<2x8x32xf32>
    %30 = vector.shape_cast %24 : vector<2x8x32xf32> to vector<1x2x8x32xf32>
    tpu.vector_store %arg7[%c0_25, %c0_26, %c0_27, %c0_28], %30 {strides = array<i32>} : memref<1x2x8x32xf32, #tpu.memory_space<vmem>>, vector<1x2x8x32xf32>,
    return
  }
  func.func @transform_0(%arg0: i32, %arg1: i32, %arg2: i32) -> (i32, i32, i32, i32) {
    %c0_i32 = arith.constant 0 : i32
    %c0_i32_0 = arith.constant 0 : i32
    return %arg0, %arg1, %arg2, %c0_i32 : i32, i32, i32, i32
  }
  func.func @transform_1(%arg0: i32, %arg1: i32, %arg2: i32) -> (i32, i32, i32, i32) {
    %c0_i32 = arith.constant 0 : i32
    %c0_i32_0 = arith.constant 0 : i32
    %c0_i32_1 = arith.constant 0 : i32
    return %arg0, %arg1, %c0_i32, %c0_i32_0 : i32, i32, i32, i32
  }
  func.func @transform_2(%arg0: i32, %arg1: i32, %arg2: i32) -> (i32, i32, i32, i32) {
    %c0_i32 = arith.constant 0 : i32
    %c0_i32_0 = arith.constant 0 : i32
    %c0_i32_1 = arith.constant 0 : i32
    return %arg0, %arg1, %c0_i32, %c0_i32_0 : i32, i32, i32, i32
  }
  func.func @transform_3(%arg0: i32, %arg1: i32, %arg2: i32) -> (i32, i32, i32, i32) {
    %c0_i32 = arith.constant 0 : i32
    %c0_i32_0 = arith.constant 0 : i32
    return %arg0, %arg1, %arg2, %c0_i32 : i32, i32, i32, i32
  }
  func.func @transform_4(%arg0: i32, %arg1: i32, %arg2: i32) -> (i32, i32, i32, i32) {
    %c0_i32 = arith.constant 0 : i32
    %c0_i32_0 = arith.constant 0 : i32
    return %arg0, %arg1, %arg2, %c0_i32 : i32, i32, i32, i32
  }
  func.func @transform_5(%arg0: i32, %arg1: i32, %arg2: i32) -> (i32, i32, i32, i32) {
    %c0_i32 = arith.constant 0 : i32
    %c0_i32_0 = arith.constant 0 : i32
    return %arg0, %arg1, %arg2, %c0_i32 : i32, i32, i32, i32
  }
}

</mosaic_0001>

<llo_original>
// kernel: tpu_custom_call.1
$region0: #{tpu_custom_call.1}
  #allocation0 [shape = 'u32[]', space=smem, size = 0x4, offset = 0x4, fixed_abs, tag = 'smem constant byte address 0x4 - core index']
  #allocation1 [shape = 'u32[144,128]{1,0:T(1,128)}', space=vmem, size = 0x12000, scoped, tag = 'internal scratch']
  %s0 = inlined_call_operand.vmem [shape: f32[2,2,8,32], index: 0, kind: input, shape index: {}]
  %s1 = inlined_call_operand.hbm [shape: f32[2,2,8,32], index: 1, kind: input, shape index: {}]
  %s2 = inlined_call_operand.hbm [shape: f32[2,2,8,32], index: 2, kind: input, shape index: {}]
  %s3 = inlined_call_operand.vmem [shape: s32[2,2,8,8], index: 3, kind: input, shape index: {}]
  %s4 = inlined_call_operand.hbm [shape: f32[2,2,8,32], index: 4, kind: output, shape index: {0}]
  %s5 = inlined_call_operand.hbm [shape: f32[2,2,8,8], index: 5, kind: output, shape index: {1}]
  %6 = xla_tuple %s4, %s5
  %s7 = sld [smem:[#allocation0]]
  $region65: #{tpu_custom_call.1} parent=0
    _
  %s9 = ssub.s32 1, %s7
  %s10 = scalar_select 0, %s9, %s7
  $region1: #{tpu_custom_call.1} parent=0
    #allocation2 [shape = 'u8[16384]{0}', space=vmem, size = 0x4000, scoped, tag = 'input window, operand 1']
    #allocation3 [shape = 's32[2]{0}', space=sflag, size = 0x8, scoped, tag = 'scoped memory for tpu_custom_call.1']
    #allocation4 [shape = 's32[2]{0}', space=sflag, size = 0x8, scoped, tag = 'scoped memory for tpu_custom_call.1']
    #allocation5 [shape = 'u8[16384]{0}', space=vmem, size = 0x4000, scoped, tag = 'input window, operand 2']
    #allocation6 [shape = 's32[2]{0}', space=sflag, size = 0x8, scoped, tag = 'scoped memory for tpu_custom_call.1']
    #allocation7 [shape = 'u8[16384]{0}', space=vmem, size = 0x4000, scoped, tag = 'output window, operand 0']
    #allocation8 [shape = 'u8[16384]{0}', space=vmem, size = 0x4000, scoped, tag = 'output window, operand 1']
    #allocation9 [shape = 's32[2]{0}', space=sflag, size = 0x8, scoped, tag = 'scoped memory for tpu_custom_call.1']
    %11 = vsyncpa [#allocation3], 0
    %s12 = scalar_lea.sflag [#allocation3], 1
    %13 = vsyncpa %s12, 0
    %14 = vsyncpa [#allocation6], 0
    %s15 = scalar_lea.sflag [#allocation6], 1
    %16 = vsyncpa %s15, 0
    %17 = vsyncpa [#allocation4], 0
    %s18 = scalar_lea.sflag [#allocation4], 1
    %19 = vsyncpa %s18, 0
    %20 = vsyncpa [#allocation9], 0
    %s21 = scalar_lea.sflag [#allocation9], 1
    %22 = vsyncpa %s21, 0
    loop: start=0, step=1, limit=4
    $region2: #{tpu_custom_call.1} parent=1 // loop_pre_header
      _
    $region3: #{tpu_custom_call.1} parent=1 // loop_header
      %s24 = sphi 0, %s28
      %p25 = scmp.ge.s32.totalorder %s24, 4
      %s31 = sphi 0, %s50
      %s32 = sphi 0, %s46
      %s33 = sphi 0, %s42
      %s34 = sphi 0, %s31
      %s35 = sphi 0, %s32
      %s36 = sphi 0, %s33
      %s37 = sphi 0, %s34
      %s38 = sphi 0, %s35
      %s39 = sphi 0, %s36
      %s57 = sphi 0, %s59
      %s60 = sphi 0, %s57
      %s61 = sphi 0, %s60
      %s77 = sphi 0, %s61
      %s85 = sphi 0, %s87
      %s88 = sphi 0, %s85
      %s89 = sphi 0, %s88
      %s105 = sphi 0, %s89
      %s113 = sphi 0, %s115
      %s116 = sphi 0, %s113
      %s117 = sphi 0, %s116
      %s133 = sphi 0, %s117
      %s143 = sphi 0, %s145
      %s146 = sphi 0, %s143
      %s147 = sphi 0, %s146
      %s163 = sphi 0, %s147
      %s173 = sphi 0, %s175
      %s176 = sphi 0, %s173
      %s177 = sphi 0, %s176
      %s193 = sphi 0, %s177
      %s203 = sphi 0, %s205
      %s206 = sphi 0, %s203
      %s207 = sphi 0, %s206
      %s223 = sphi 0, %s207
    $region4: #{tpu_custom_call.1} parent=1 // loop_header_branch
      %27 = sbr.rel (%p25) target = $region8
    $region5: #{tpu_custom_call.1} parent=1 // loop_body
      %s29 = ssub.s32 %s24, 1
      %s30 = ssub.s32 %s24, 2
      %s40 = sadd.s32 1, %s33
      %p41 = scmp.ge.s32.totalorder %s40, 1
      %s42 = scalar_select %p41, 0, %s40
      %s43 = sadd.s32 1, %s32
      %s44 = scalar_select %p41, %s43, %s32
      %p45 = scmp.ge.s32.totalorder %s44, 1
      %s46 = scalar_select %p45, 0, %s44
      %s47 = sadd.s32 1, %s31
      %s48 = scalar_select %p45, %s47, %s31
      %p49 = scmp.ge.s32.totalorder %s48, 2
      %s50 = scalar_select %p49, 0, %s48
      %s51 = ssub.s32 %s31, %s50
      %s52 = ssub.s32 %s32, %s46
      %s53 = sor.u32 %s51, %s52
      %s54 = ssub.s32 %s33, %s42
      %s55 = sor.u32 %s53, %s54
      %p56 = scmp.eq.s32.totalorder %s55, 0
      %s58 = sadd.s32 %s57, 1
      %s59 = scalar_select %p56, %s57, %s58
      %p62 = pneg %p56
      %p63 = scmp.eq.s32.totalorder %s24, 1
      %p64 = por %p62, %p63
      %p65 = scmp.ne.s32.totalorder %s57, %s60
      %p66 = scmp.eq.s32.totalorder %s24, 0
      %p67 = por %p65, %p66
      %p68 = scmp.ne.s32.totalorder %s57, %s60
      %p69 = scmp.eq.s32.totalorder %s29, 1
      %p70 = por %p68, %p69
      %p71 = scmp.ne.s32.totalorder %s60, %s61
      %p72 = scmp.eq.s32.totalorder %s29, 0
      %p73 = por %p71, %p72
      %p74 = scmp.ne.s32.totalorder %s60, %s61
      %p75 = scmp.eq.s32.totalorder %s30, 1
      %p76 = por %p74, %p75
      %p78 = scmp.ne.s32.totalorder %s61, %s77
      %p79 = scmp.eq.s32.totalorder %s30, 0
      %p80 = por %p78, %p79
      %s81 = ssub.s32 %s31, %s50
      %s82 = ssub.s32 %s32, %s46
      %s83 = sor.u32 %s81, %s82
      %p84 = scmp.eq.s32.totalorder %s83, 0
      %s86 = sadd.s32 %s85, 1
      %s87 = scalar_select %p84, %s85, %s86
      %p90 = pneg %p84
      %p91 = scmp.eq.s32.totalorder %s24, 1
      %p92 = por %p90, %p91
      %p93 = scmp.ne.s32.totalorder %s85, %s88
      %p94 = scmp.eq.s32.totalorder %s24, 0
      %p95 = por %p93, %p94
      %p96 = scmp.ne.s32.totalorder %s85, %s88
      %p97 = scmp.eq.s32.totalorder %s29, 1
      %p98 = por %p96, %p97
      %p99 = scmp.ne.s32.totalorder %s88, %s89
      %p100 = scmp.eq.s32.totalorder %s29, 0
      %p101 = por %p99, %p100
      %p102 = scmp.ne.s32.totalorder %s88, %s89
      %p103 = scmp.eq.s32.totalorder %s30, 1
      %p104 = por %p102, %p103
      %p106 = scmp.ne.s32.totalorder %s89, %s105
      %p107 = scmp.eq.s32.totalorder %s30, 0
      %p108 = por %p106, %p107
      %s109 = ssub.s32 %s31, %s50
      %s110 = ssub.s32 %s32, %s46
      %s111 = sor.u32 %s109, %s110
      %p112 = scmp.eq.s32.totalorder %s111, 0
      %s114 = sadd.s32 %s113, 1
      %s115 = scalar_select %p112, %s113, %s114
      %p118 = pneg %p112
      %p119 = scmp.eq.s32.totalorder %s24, 1
      %p120 = por %p118, %p119
      %p121 = scmp.ne.s32.totalorder %s113, %s116
      %p122 = scmp.eq.s32.totalorder %s24, 0
      %p123 = por %p121, %p122
      %p124 = scmp.ne.s32.totalorder %s113, %s116
      %p125 = scmp.eq.s32.totalorder %s29, 1
      %p126 = por %p124, %p125
      %p127 = scmp.ne.s32.totalorder %s116, %s117
      %p128 = scmp.eq.s32.totalorder %s29, 0
      %p129 = por %p127, %p128
      %p130 = scmp.ne.s32.totalorder %s116, %s117
      %p131 = scmp.eq.s32.totalorder %s30, 1
      %p132 = por %p130, %p131
      %p134 = scmp.ne.s32.totalorder %s117, %s133
      %p135 = scmp.eq.s32.totalorder %s30, 0
      %p136 = por %p134, %p135
      %s137 = ssub.s32 %s31, %s50
      %s138 = ssub.s32 %s32, %s46
      %s139 = sor.u32 %s137, %s138
      %s140 = ssub.s32 %s33, %s42
      %s141 = sor.u32 %s139, %s140
      %p142 = scmp.eq.s32.totalorder %s141, 0
      %s144 = sadd.s32 %s143, 1
      %s145 = scalar_select %p142, %s143, %s144
      %p148 = pneg %p142
      %p149 = scmp.eq.s32.totalorder %s24, 1
      %p150 = por %p148, %p149
      %p151 = scmp.ne.s32.totalorder %s143, %s146
      %p152 = scmp.eq.s32.totalorder %s24, 0
      %p153 = por %p151, %p152
      %p154 = scmp.ne.s32.totalorder %s143, %s146
      %p155 = scmp.eq.s32.totalorder %s29, 1
      %p156 = por %p154, %p155
      %p157 = scmp.ne.s32.totalorder %s146, %s147
      %p158 = scmp.eq.s32.totalorder %s29, 0
      %p159 = por %p157, %p158
      %p160 = scmp.ne.s32.totalorder %s146, %s147
      %p161 = scmp.eq.s32.totalorder %s30, 1
      %p162 = por %p160, %p161
      %p164 = scmp.ne.s32.totalorder %s147, %s163
      %p165 = scmp.eq.s32.totalorder %s30, 0
      %p166 = por %p164, %p165
      %s167 = ssub.s32 %s31, %s50
      %s168 = ssub.s32 %s32, %s46
      %s169 = sor.u32 %s167, %s168
      %s170 = ssub.s32 %s33, %s42
      %s171 = sor.u32 %s169, %s170
      %p172 = scmp.eq.s32.totalorder %s171, 0
      %s174 = sadd.s32 %s173, 1
      %s175 = scalar_select %p172, %s173, %s174
      %p178 = pneg %p172
      %p179 = scmp.eq.s32.totalorder %s24, 1
      %p180 = por %p178, %p179
      %p181 = scmp.ne.s32.totalorder %s173, %s176
      %p182 = scmp.eq.s32.totalorder %s24, 0
      %p183 = por %p181, %p182
      %p184 = scmp.ne.s32.totalorder %s173, %s176
      %p185 = scmp.eq.s32.totalorder %s29, 1
      %p186 = por %p184, %p185
      %p187 = scmp.ne.s32.totalorder %s176, %s177
      %p188 = scmp.eq.s32.totalorder %s29, 0
      %p189 = por %p187, %p188
      %p190 = scmp.ne.s32.totalorder %s176, %s177
      %p191 = scmp.eq.s32.totalorder %s30, 1
      %p192 = por %p190, %p191
      %p194 = scmp.ne.s32.totalorder %s177, %s193
      %p195 = scmp.eq.s32.totalorder %s30, 0
      %p196 = por %p194, %p195
      %s197 = ssub.s32 %s31, %s50
      %s198 = ssub.s32 %s32, %s46
      %s199 = sor.u32 %s197, %s198
      %s200 = ssub.s32 %s33, %s42
      %s201 = sor.u32 %s199, %s200
      %p202 = scmp.eq.s32.totalorder %s201, 0
      %s204 = sadd.s32 %s203, 1
      %s205 = scalar_select %p202, %s203, %s204
      %p208 = pneg %p202
      %p209 = scmp.eq.s32.totalorder %s24, 1
      %p210 = por %p208, %p209
      %p211 = scmp.ne.s32.totalorder %s203, %s206
      %p212 = scmp.eq.s32.totalorder %s24, 0
      %p213 = por %p211, %p212
      %p214 = scmp.ne.s32.totalorder %s203, %s206
      %p215 = scmp.eq.s32.totalorder %s29, 1
      %p216 = por %p214, %p215
      %p217 = scmp.ne.s32.totalorder %s206, %s207
      %p218 = scmp.eq.s32.totalorder %s29, 0
      %p219 = por %p217, %p218
      %p220 = scmp.ne.s32.totalorder %s206, %s207
      %p221 = scmp.eq.s32.totalorder %s30, 1
      %p222 = por %p220, %p221
      %p224 = scmp.ne.s32.totalorder %s207, %s223
      %p225 = scmp.eq.s32.totalorder %s30, 0
      %p226 = por %p224, %p225
      %p227 = scmp.le.s32.totalorder 1, %s24
      %p228 = scmp.lt.s32.totalorder %s24, 3
      %p229 = pnand %p227, %p228
      %p230 = pneg %p229
      // Predicated region
      $region9: #{tpu_custom_call.1} parent=5 // pred_check
        _
      $region10: #{tpu_custom_call.1} parent=5 // pred_check_branch
        %232 = sbr.rel (%p229) target = $region12
      $region11: #{tpu_custom_call.1} parent=5 // pred_region
        %s233 = ssub.s32 %s24, 1
      $region12: #{tpu_custom_call.1} parent=5 // pred_fallthru
        _
      %p234 = scmp.lt.s32.totalorder %s24, 2
      // Predicated region
      $region13: #{tpu_custom_call.1} parent=5 // pred_check
        %p235 = pneg %p234
      $region14: #{tpu_custom_call.1} parent=5 // pred_check_branch
        %237 = sbr.rel (%p235) target = $region16
      $region15: #{tpu_custom_call.1} parent=5 // pred_region
        // Predicated region
        $region17: #{tpu_custom_call.1} parent=15 // pred_check
          %p238 = pneg %p67
        $region18: #{tpu_custom_call.1} parent=15 // pred_check_branch
          %240 = sbr.rel (%p238) target = $region20
        $region19: #{tpu_custom_call.1} parent=15 // pred_region
          %s241 = smul.u32 2, %s32
          %p242 = scmp.lt.s32.totalorder %s31, 1
          %s243 = scalar_select %p242, %s31, 1
          %p244 = scmp.lt.s32.totalorder %s241, 1
          %s245 = scalar_select %p244, %s241, 1
          %p246 = scmp.lt.s32.totalorder %s33, 0
          %s247 = scalar_select %p246, %s33, 0
          %s248 = sadd.s32 %s247, %s245
          %s249 = smul.addr %s243, 2
          %s250 = sadd.s32 %s248, %s249
          %s251 = smul.addr %s250, 8
          %s252 = scalar_lea.vmem %s0, %s251
          %s253 = smul.u32 2, %s32
        $region20: #{tpu_custom_call.1} parent=15 // pred_fallthru
          _
        // Predicated region
        $region21: #{tpu_custom_call.1} parent=15 // pred_check
          %p254 = pneg %p95
        $region22: #{tpu_custom_call.1} parent=15 // pred_check_branch
          %256 = sbr.rel (%p254) target = $region24
        $region23: #{tpu_custom_call.1} parent=15 // pred_region
          %s257 = sand.u32 %s85, 1
          %s258 = scalar_lea.sflag [#allocation3], %s257
          %s259 = sand.u32 %s85, 1
          %s260 = smul.addr %s259, 16
          %s261 = scalar_lea.vmem [#allocation2], %s260
          %s262 = smul.u32 2, %s32
          %s264 = ssub.s32 256, 256
          %265 = vsyncadd %s258, %s264
          %s266 = smul.addr %s31, 2
          %s267 = sadd.s32 %s262, %s266
          %s268 = smul.addr %s267, 128
          %s269 = scalar_lea.hbm %s1, %s268
          %s270 = sshll.u32 %s261, 4
          %s271 = int_to_ptr.vmem [resolvable:$true] %s270
          %276 = dma.hbm_to_vmem [thread:$0]  %s269, 256, %s271, %s258, 128, 128, 8
        $region24: #{tpu_custom_call.1} parent=15 // pred_fallthru
          _
        // Predicated region
        $region25: #{tpu_custom_call.1} parent=15 // pred_check
          %p277 = pneg %p123
        $region26: #{tpu_custom_call.1} parent=15 // pred_check_branch
          %279 = sbr.rel (%p277) target = $region28
        $region27: #{tpu_custom_call.1} parent=15 // pred_region
          %s280 = sand.u32 %s113, 1
          %s281 = scalar_lea.sflag [#allocation6], %s280
          %s282 = sand.u32 %s113, 1
          %s283 = smul.addr %s282, 16
          %s284 = scalar_lea.vmem [#allocation5], %s283
          %s285 = smul.u32 2, %s32
          %s287 = ssub.s32 256, 256
          %288 = vsyncadd %s281, %s287
          %s289 = smul.addr %s31, 2
          %s290 = sadd.s32 %s285, %s289
          %s291 = smul.addr %s290, 128
          %s292 = scalar_lea.hbm %s2, %s291
          %s293 = sshll.u32 %s284, 4
          %s294 = int_to_ptr.vmem [resolvable:$true] %s293
          %299 = dma.hbm_to_vmem [thread:$0]  %s292, 256, %s294, %s281, 128, 128, 8
        $region28: #{tpu_custom_call.1} parent=15 // pred_fallthru
          _
        // Predicated region
        $region29: #{tpu_custom_call.1} parent=15 // pred_check
          %p300 = pneg %p153
        $region30: #{tpu_custom_call.1} parent=15 // pred_check_branch
          %302 = sbr.rel (%p300) target = $region32
        $region31: #{tpu_custom_call.1} parent=15 // pred_region
          %s303 = smul.u32 2, %s32
          %p304 = scmp.lt.s32.totalorder %s31, 1
          %s305 = scalar_select %p304, %s31, 1
          %p306 = scmp.lt.s32.totalorder %s303, 1
          %s307 = scalar_select %p306, %s303, 1
          %p308 = scmp.lt.s32.totalorder %s33, 0
          %s309 = scalar_select %p308, %s33, 0
          %s310 = sadd.s32 %s309, %s307
          %s311 = smul.addr %s305, 2
          %s312 = sadd.s32 %s310, %s311
          %s313 = smul.addr %s312, 8
          %s314 = scalar_lea.vmem %s3, %s313
          %s315 = smul.u32 2, %s32
        $region32: #{tpu_custom_call.1} parent=15 // pred_fallthru
          _
      $region16: #{tpu_custom_call.1} parent=5 // pred_fallthru
        _
      %p316 = scmp.le.s32.totalorder 1, %s24
      %p317 = scmp.lt.s32.totalorder %s24, 3
      %p318 = pnand %p316, %p317
      %p319 = pneg %p318
      // Predicated region
      $region33: #{tpu_custom_call.1} parent=5 // pred_check
        _
      $region34: #{tpu_custom_call.1} parent=5 // pred_check_branch
        %321 = sbr.rel (%p318) target = $region36
      $region35: #{tpu_custom_call.1} parent=5 // pred_region
        %s322 = ssub.s32 %s24, 1
        %s323 = sand.u32 %s88, 1
        %s324 = scalar_lea.sflag [#allocation3], %s323
        %s325 = sand.u32 %s88, 1
        %s326 = smul.addr %s325, 16
        %s327 = scalar_lea.vmem [#allocation2], %s326
        // Predicated region
        $region37: #{tpu_custom_call.1} parent=35 // pred_check
          %p328 = pneg %p101
        $region38: #{tpu_custom_call.1} parent=35 // pred_check_branch
          %330 = sbr.rel (%p328) target = $region40
        $region39: #{tpu_custom_call.1} parent=35 // pred_region
          %331 = dma.done %s324, 256
        $region40: #{tpu_custom_call.1} parent=35 // pred_fallthru
          _
        %s332 = sand.u32 %s116, 1
        %s333 = scalar_lea.sflag [#allocation6], %s332
        %s334 = sand.u32 %s116, 1
        %s335 = smul.addr %s334, 16
        %s336 = scalar_lea.vmem [#allocation5], %s335
        // Predicated region
        $region41: #{tpu_custom_call.1} parent=35 // pred_check
          %p337 = pneg %p129
        $region42: #{tpu_custom_call.1} parent=35 // pred_check_branch
          %339 = sbr.rel (%p337) target = $region44
        $region43: #{tpu_custom_call.1} parent=35 // pred_region
          %340 = dma.done %s333, 256
        $region44: #{tpu_custom_call.1} parent=35 // pred_fallthru
          _
        %s341 = smul.u32 2, %s35
        %p342 = scmp.lt.s32.totalorder %s34, 1
        %s343 = scalar_select %p342, %s34, 1
        %p344 = scmp.lt.s32.totalorder %s341, 1
        %s345 = scalar_select %p344, %s341, 1
        %p346 = scmp.lt.s32.totalorder %s36, 0
        %s347 = scalar_select %p346, %s36, 0
        %s348 = sadd.s32 %s347, %s345
        %s349 = smul.addr %s343, 2
        %s350 = sadd.s32 %s348, %s349
        %s351 = smul.addr %s350, 8
        %s352 = scalar_lea.vmem %s0, %s351
        %p353 = pneg %p73
        %p354 = pneg %p70
        %s355 = sand.u32 %s88, 1
        %s356 = scalar_lea.sflag [#allocation3], %s355
        %s357 = sand.u32 %s88, 1
        %s358 = smul.addr %s357, 16
        %s359 = scalar_lea.vmem [#allocation2], %s358
        %p360 = pneg %p101
        %p361 = pneg %p98
        %s362 = sand.u32 %s116, 1
        %s363 = scalar_lea.sflag [#allocation6], %s362
        %s364 = sand.u32 %s116, 1
        %s365 = smul.addr %s364, 16
        %s366 = scalar_lea.vmem [#allocation5], %s365
        %p367 = pneg %p129
        %p368 = pneg %p126
        %s369 = smul.u32 2, %s35
        %p370 = scmp.lt.s32.totalorder %s34, 1
        %s371 = scalar_select %p370, %s34, 1
        %p372 = scmp.lt.s32.totalorder %s369, 1
        %s373 = scalar_select %p372, %s369, 1
        %p374 = scmp.lt.s32.totalorder %s36, 0
        %s375 = scalar_select %p374, %s36, 0
        %s376 = sadd.s32 %s375, %s373
        %s377 = smul.addr %s371, 2
        %s378 = sadd.s32 %s376, %s377
        %s379 = smul.addr %s378, 8
        %s380 = scalar_lea.vmem %s3, %s379
        %p381 = pneg %p159
        %p382 = pneg %p156
        %p383 = pneg %p189
        %p384 = pneg %p186
        %s385 = sand.u32 %s176, 1
        %s386 = scalar_lea.sflag [#allocation4], %s385
        %s387 = sand.u32 %s176, 1
        %s388 = smul.addr %s387, 16
        %s389 = scalar_lea.vmem [#allocation7], %s388
        %p390 = pneg %p219
        %p391 = pneg %p216
        %s392 = sand.u32 %s206, 1
        %s393 = scalar_lea.sflag [#allocation9], %s392
        %s394 = sand.u32 %s206, 1
        %s395 = smul.addr %s394, 16
        %s396 = scalar_lea.vmem [#allocation8], %s395
        %s397 = smul.u32 2, %s35
        %p398 = scmp.lt.s32.totalorder %s34, 1
        %s399 = scalar_select %p398, %s34, 1
        %p400 = scmp.lt.s32.totalorder %s397, 1
        %s401 = scalar_select %p400, %s397, 1
        %p402 = scmp.lt.s32.totalorder %s36, 0
        %s403 = scalar_select %p402, %s36, 0
        %s404 = sadd.s32 %s403, %s401
        %s405 = smul.addr %s399, 2
        %s406 = sadd.s32 %s404, %s405
        %s407 = smul.addr %s406, 8
        %s408 = scalar_lea.vmem %s0, %s407
        %s409 = smul.u32 2, %s35
        %s410 = smul.u32 2, %s35
        %s411 = smul.u32 2, %s35
        %s412 = smul.u32 2, %s35
        %p413 = scmp.lt.s32.totalorder %s34, 1
        %s414 = scalar_select %p413, %s34, 1
        %p415 = scmp.lt.s32.totalorder %s412, 1
        %s416 = scalar_select %p415, %s412, 1
        %p417 = scmp.lt.s32.totalorder %s36, 0
        %s418 = scalar_select %p417, %s36, 0
        %s419 = sadd.s32 %s418, %s416
        %s420 = smul.addr %s414, 2
        %s421 = sadd.s32 %s419, %s420
        %s422 = smul.addr %s421, 8
        %s423 = scalar_lea.vmem %s3, %s422
        %s424 = smul.u32 2, %s35
        %s425 = smul.u32 2, %s35
        %s426 = smul.u32 2, %s35
        %v427 = vld [vmem:[%s408] sm:$0xff]
        %v428 = vld [vmem:[%s408 + $0x8] sm:$0xff]
        %v429 = vmul.f32 %v427, 0.17677669
        %v430 = vmul.f32 %v428, 0.17677669
        %v431 = vld [vmem:[%s327] sm:$0xff]
        %v432 = vld [vmem:[%s327 + $0x8] sm:$0xff]
        %v433 = vld [vmem:[%s336] sm:$0xff]
        %v434 = vld [vmem:[%s336 + $0x8] sm:$0xff]
        %vm435 = vcmask 261120
        %v437 = vsel %vm435, %v429, 0
        %v440 = vsel %vm435, %v431, 0
        %442 = vmatprep.subr.mxu0 0.0
        %443 = vmatpush1.xpose.msra.mxu0 0.0
        %444 = vmatprep.subr.mxu0 0.0
        %445 = vmatpush1.xpose.msra.mxu0 0.0
        %446 = vmatprep.subr.mxu0 0.0
        %447 = vmatpush1.xpose.msra.mxu0 0.0
        %448 = vmatprep.subr.mxu0 0.0
        %449 = vmatpush1.xpose.msra.mxu0 0.0
        %450 = vmatprep.subr.mxu0 0.0
        %451 = vmatpush1.xpose.msra.mxu0 0.0
        %452 = vmatprep.subr.mxu0 0.0
        %453 = vmatpush1.xpose.msra.mxu0 0.0
        %454 = vmatprep.subr.mxu0 0.0
        %455 = vmatpush1.xpose.msra.mxu0 0.0
        %456 = vmatprep.subr.mxu0 0.0
        %457 = vmatpush1.xpose.msra.mxu0 0.0
        %458 = vmatprep.subr.mxu0 0.0
        %459 = vmatpush1.xpose.msra.mxu0 0.0
        %460 = vmatprep.subr.mxu0 0.0
        %461 = vmatpush1.xpose.msra.mxu0 0.0
        %462 = vmatprep.subr.mxu0 0.0
        %463 = vmatpush1.xpose.msra.mxu0 0.0
        %464 = vmatprep.subr.mxu0 0.0
        %465 = vmatpush1.xpose.msra.mxu0 0.0
        %466 = vmatprep.subr.mxu0 0.0
        %467 = vmatpush1.xpose.msra.mxu0 0.0
        %468 = vmatprep.subr.mxu0 0.0
        %469 = vmatpush1.xpose.msra.mxu0 0.0
        %470 = vmatprep.subr.mxu0 0.0
        %471 = vmatpush1.xpose.msra.mxu0 0.0
        %472 = vmatprep.subr.mxu0 0.0
        %473 = vmatpush1.xpose.msra.mxu0 %v440
        %474 = vmatprep.subr.mxu0 0.0
        %475 = vmatpush2.xpose.msra.mxu0 0.0
        %476 = vmatprep.subr.mxu0 0.0
        %477 = vmatpush2.xpose.msra.mxu0 0.0
        %478 = vmatprep.subr.mxu0 0.0
        %479 = vmatpush2.xpose.msra.mxu0 0.0
        %480 = vmatprep.subr.mxu0 0.0
        %481 = vmatpush2.xpose.msra.mxu0 0.0
        %482 = vmatprep.subr.mxu0 0.0
        %483 = vmatpush2.xpose.msra.mxu0 0.0
        %484 = vmatprep.subr.mxu0 0.0
        %485 = vmatpush2.xpose.msra.mxu0 0.0
        %486 = vmatprep.subr.mxu0 0.0
        %487 = vmatpush2.xpose.msra.mxu0 0.0
        %488 = vmatprep.subr.mxu0 0.0
        %489 = vmatpush2.xpose.msra.mxu0 0.0
        %490 = vmatprep.subr.mxu0 0.0
        %491 = vmatpush2.xpose.msra.mxu0 0.0
        %492 = vmatprep.subr.mxu0 0.0
        %493 = vmatpush2.xpose.msra.mxu0 0.0
        %494 = vmatprep.subr.mxu0 0.0
        %495 = vmatpush2.xpose.msra.mxu0 0.0
        %496 = vmatprep.subr.mxu0 0.0
        %497 = vmatpush2.xpose.msra.mxu0 0.0
        %498 = vmatprep.subr.mxu0 0.0
        %499 = vmatpush2.xpose.msra.mxu0 0.0
        %500 = vmatprep.subr.mxu0 0.0
        %501 = vmatpush2.xpose.msra.mxu0 0.0
        %502 = vmatprep.subr.mxu0 0.0
        %503 = vmatpush2.xpose.msra.mxu0 0.0
        %504 = vmatprep.subr.mxu0 0.0
        %505 = vmatpush2.xpose.msra.mxu0 0.0
        %506 = vmatprep.mubr.f32.mxu0 0.0
        %507 = vmatmul.mubr.f32.gmra.mxu0 %v437
        %v508 = vpop.f32.mrf.mxu0
        %v509 = vadd.f32 0.0, %v508
        %v510 = vpop.f32.mrf.mxu0
        %511 = vdwg.mxu0
        %v513 = vsel %vm435, %v430, 0
        %v516 = vsel %vm435, %v432, 0
        %518 = vmatprep.subr.mxu0 0.0
        %519 = vmatpush1.xpose.msra.mxu0 0.0
        %520 = vmatprep.subr.mxu0 0.0
        %521 = vmatpush1.xpose.msra.mxu0 0.0
        %522 = vmatprep.subr.mxu0 0.0
        %523 = vmatpush1.xpose.msra.mxu0 0.0
        %524 = vmatprep.subr.mxu0 0.0
        %525 = vmatpush1.xpose.msra.mxu0 0.0
        %526 = vmatprep.subr.mxu0 0.0
        %527 = vmatpush1.xpose.msra.mxu0 0.0
        %528 = vmatprep.subr.mxu0 0.0
        %529 = vmatpush1.xpose.msra.mxu0 0.0
        %530 = vmatprep.subr.mxu0 0.0
        %531 = vmatpush1.xpose.msra.mxu0 0.0
        %532 = vmatprep.subr.mxu0 0.0
        %533 = vmatpush1.xpose.msra.mxu0 0.0
        %534 = vmatprep.subr.mxu0 0.0
        %535 = vmatpush1.xpose.msra.mxu0 0.0
        %536 = vmatprep.subr.mxu0 0.0
        %537 = vmatpush1.xpose.msra.mxu0 0.0
        %538 = vmatprep.subr.mxu0 0.0
        %539 = vmatpush1.xpose.msra.mxu0 0.0
        %540 = vmatprep.subr.mxu0 0.0
        %541 = vmatpush1.xpose.msra.mxu0 0.0
        %542 = vmatprep.subr.mxu0 0.0
        %543 = vmatpush1.xpose.msra.mxu0 0.0
        %544 = vmatprep.subr.mxu0 0.0
        %545 = vmatpush1.xpose.msra.mxu0 0.0
        %546 = vmatprep.subr.mxu0 0.0
        %547 = vmatpush1.xpose.msra.mxu0 0.0
        %548 = vmatprep.subr.mxu0 0.0
        %549 = vmatpush1.xpose.msra.mxu0 %v516
        %550 = vmatprep.subr.mxu0 0.0
        %551 = vmatpush2.xpose.msra.mxu0 0.0
        %552 = vmatprep.subr.mxu0 0.0
        %553 = vmatpush2.xpose.msra.mxu0 0.0
        %554 = vmatprep.subr.mxu0 0.0
        %555 = vmatpush2.xpose.msra.mxu0 0.0
        %556 = vmatprep.subr.mxu0 0.0
        %557 = vmatpush2.xpose.msra.mxu0 0.0
        %558 = vmatprep.subr.mxu0 0.0
        %559 = vmatpush2.xpose.msra.mxu0 0.0
        %560 = vmatprep.subr.mxu0 0.0
        %561 = vmatpush2.xpose.msra.mxu0 0.0
        %562 = vmatprep.subr.mxu0 0.0
        %563 = vmatpush2.xpose.msra.mxu0 0.0
        %564 = vmatprep.subr.mxu0 0.0
        %565 = vmatpush2.xpose.msra.mxu0 0.0
        %566 = vmatprep.subr.mxu0 0.0
        %567 = vmatpush2.xpose.msra.mxu0 0.0
        %568 = vmatprep.subr.mxu0 0.0
        %569 = vmatpush2.xpose.msra.mxu0 0.0
        %570 = vmatprep.subr.mxu0 0.0
        %571 = vmatpush2.xpose.msra.mxu0 0.0
        %572 = vmatprep.subr.mxu0 0.0
        %573 = vmatpush2.xpose.msra.mxu0 0.0
        %574 = vmatprep.subr.mxu0 0.0
        %575 = vmatpush2.xpose.msra.mxu0 0.0
        %576 = vmatprep.subr.mxu0 0.0
        %577 = vmatpush2.xpose.msra.mxu0 0.0
        %578 = vmatprep.subr.mxu0 0.0
        %579 = vmatpush2.xpose.msra.mxu0 0.0
        %580 = vmatprep.subr.mxu0 0.0
        %581 = vmatpush2.xpose.msra.mxu0 0.0
        %582 = vmatprep.mubr.f32.mxu0 0.0
        %583 = vmatmul.mubr.f32.gmra.mxu0 %v513
        %v584 = vpop.f32.mrf.mxu0
        %v585 = vadd.f32 0.0, %v584
        %v586 = vpop.f32.mrf.mxu0
        %587 = vdwg.mxu0
        %v588 = vld [vmem:[%s423] sm:$0xff]
        %v589 = vld [vmem:[%s423 + $0x8] sm:$0xff]
        %vm590 = vcmp.ne.s32.totalorder %v588, 0
        %vm591 = vcmp.ne.s32.totalorder %v589, 0
        %v592 = vsel %vm590, -1e+09, %v509
        %v593 = vsel %vm591, -1e+09, %v585
        %vm594 = vcmask 64512
        %v595 = vsel %vm594, %v592, -inf
        %596 = vmax.xlane.f32.xlu0 %v595
        %v597 = vpop.xlane.xlu0 %596
        %v598 = vsel %vm594, %v593, -inf
        %599 = vmax.xlane.f32.xlu0 %v598
        %v600 = vpop.xlane.xlu0 %599
        %v601 = vsub.f32 %v592, %v597
        %v602 = vsub.f32 %v593, %v600
        %v603 = vmul.f32 %v601, 1.442695
        %v604 = vpow.pop %v603
        %v605 = vmul.f32 %v602, 1.442695
        %v606 = vpow.pop %v605
        %v607 = vsel %vm594, %v604, 0.0
        %608 = vadd.xlane.f32.xlu0 %v607
        %v609 = vpop.xlane.xlu0 %608
        %v610 = vsel %vm594, %v606, 0.0
        %611 = vadd.xlane.f32.xlu0 %v610
        %v612 = vpop.xlane.xlu0 %611
        %v613 = vrcp.pop %v609
        %v614 = vrcp.pop %v612
        %v615 = vmul.f32 %v604, %v613
        %v616 = vmul.f32 %v606, %v614
        %v618 = vsel %vm594, %v615, 0
        %620 = vmatprep.subr.mxu0 0.0
        %621 = vmatpush1.msra.mxu0 0.0
        %622 = vmatprep.subr.mxu0 0.0
        %623 = vmatpush1.msra.mxu0 0.0
        %624 = vmatprep.subr.mxu0 0.0
        %625 = vmatpush1.msra.mxu0 0.0
        %626 = vmatprep.subr.mxu0 0.0
        %627 = vmatpush1.msra.mxu0 0.0
        %628 = vmatprep.subr.mxu0 0.0
        %629 = vmatpush1.msra.mxu0 0.0
        %630 = vmatprep.subr.mxu0 0.0
        %631 = vmatpush1.msra.mxu0 0.0
        %632 = vmatprep.subr.mxu0 0.0
        %633 = vmatpush1.msra.mxu0 0.0
        %634 = vmatprep.subr.mxu0 0.0
        %635 = vmatpush1.msra.mxu0 0.0
        %636 = vmatprep.subr.mxu0 0.0
        %637 = vmatpush1.msra.mxu0 0.0
        %638 = vmatprep.subr.mxu0 0.0
        %639 = vmatpush1.msra.mxu0 0.0
        %640 = vmatprep.subr.mxu0 0.0
        %641 = vmatpush1.msra.mxu0 0.0
        %642 = vmatprep.subr.mxu0 0.0
        %643 = vmatpush1.msra.mxu0 0.0
        %644 = vmatprep.subr.mxu0 0.0
        %645 = vmatpush1.msra.mxu0 0.0
        %646 = vmatprep.subr.mxu0 0.0
        %647 = vmatpush1.msra.mxu0 0.0
        %648 = vmatprep.subr.mxu0 0.0
        %649 = vmatpush1.msra.mxu0 0.0
        %650 = vmatprep.subr.mxu0 0.0
        %651 = vmatpush1.msra.mxu0 %v433
        %652 = vmatprep.subr.mxu0 0.0
        %653 = vmatpush2.msra.mxu0 0.0
        %654 = vmatprep.subr.mxu0 0.0
        %655 = vmatpush2.msra.mxu0 0.0
        %656 = vmatprep.subr.mxu0 0.0
        %657 = vmatpush2.msra.mxu0 0.0
        %658 = vmatprep.subr.mxu0 0.0
        %659 = vmatpush2.msra.mxu0 0.0
        %660 = vmatprep.subr.mxu0 0.0
        %661 = vmatpush2.msra.mxu0 0.0
        %662 = vmatprep.subr.mxu0 0.0
        %663 = vmatpush2.msra.mxu0 0.0
        %664 = vmatprep.subr.mxu0 0.0
        %665 = vmatpush2.msra.mxu0 0.0
        %666 = vmatprep.subr.mxu0 0.0
        %667 = vmatpush2.msra.mxu0 0.0
        %668 = vmatprep.subr.mxu0 0.0
        %669 = vmatpush2.msra.mxu0 0.0
        %670 = vmatprep.subr.mxu0 0.0
        %671 = vmatpush2.msra.mxu0 0.0
        %672 = vmatprep.subr.mxu0 0.0
        %673 = vmatpush2.msra.mxu0 0.0
        %674 = vmatprep.subr.mxu0 0.0
        %675 = vmatpush2.msra.mxu0 0.0
        %676 = vmatprep.subr.mxu0 0.0
        %677 = vmatpush2.msra.mxu0 0.0
        %678 = vmatprep.subr.mxu0 0.0
        %679 = vmatpush2.msra.mxu0 0.0
        %680 = vmatprep.subr.mxu0 0.0
        %681 = vmatpush2.msra.mxu0 0.0
        %682 = vmatprep.subr.mxu0 0.0
        %683 = vmatpush2.msra.mxu0 0.0
        %684 = vmatprep.mubr.f32.mxu0 0.0
        %685 = vmatmul.mubr.f32.gmra.mxu0 %v618
        %v686 = vpop.f32.mrf.mxu0
        %v687 = vadd.f32 0.0, %v686
        %v688 = vpop.f32.mrf.mxu0
        %689 = vdwg.mxu0
        %v691 = vsel %vm594, %v616, 0
        %693 = vmatprep.subr.mxu0 0.0
        %694 = vmatpush1.msra.mxu0 0.0
        %695 = vmatprep.subr.mxu0 0.0
        %696 = vmatpush1.msra.mxu0 0.0
        %697 = vmatprep.subr.mxu0 0.0
        %698 = vmatpush1.msra.mxu0 0.0
        %699 = vmatprep.subr.mxu0 0.0
        %700 = vmatpush1.msra.mxu0 0.0
        %701 = vmatprep.subr.mxu0 0.0
        %702 = vmatpush1.msra.mxu0 0.0
        %703 = vmatprep.subr.mxu0 0.0
        %704 = vmatpush1.msra.mxu0 0.0
        %705 = vmatprep.subr.mxu0 0.0
        %706 = vmatpush1.msra.mxu0 0.0
        %707 = vmatprep.subr.mxu0 0.0
        %708 = vmatpush1.msra.mxu0 0.0
        %709 = vmatprep.subr.mxu0 0.0
        %710 = vmatpush1.msra.mxu0 0.0
        %711 = vmatprep.subr.mxu0 0.0
        %712 = vmatpush1.msra.mxu0 0.0
        %713 = vmatprep.subr.mxu0 0.0
        %714 = vmatpush1.msra.mxu0 0.0
        %715 = vmatprep.subr.mxu0 0.0
        %716 = vmatpush1.msra.mxu0 0.0
        %717 = vmatprep.subr.mxu0 0.0
        %718 = vmatpush1.msra.mxu0 0.0
        %719 = vmatprep.subr.mxu0 0.0
        %720 = vmatpush1.msra.mxu0 0.0
        %721 = vmatprep.subr.mxu0 0.0
        %722 = vmatpush1.msra.mxu0 0.0
        %723 = vmatprep.subr.mxu0 0.0
        %724 = vmatpush1.msra.mxu0 %v434
        %725 = vmatprep.subr.mxu0 0.0
        %726 = vmatpush2.msra.mxu0 0.0
        %727 = vmatprep.subr.mxu0 0.0
        %728 = vmatpush2.msra.mxu0 0.0
        %729 = vmatprep.subr.mxu0 0.0
        %730 = vmatpush2.msra.mxu0 0.0
        %731 = vmatprep.subr.mxu0 0.0
        %732 = vmatpush2.msra.mxu0 0.0
        %733 = vmatprep.subr.mxu0 0.0
        %734 = vmatpush2.msra.mxu0 0.0
        %735 = vmatprep.subr.mxu0 0.0
        %736 = vmatpush2.msra.mxu0 0.0
        %737 = vmatprep.subr.mxu0 0.0
        %738 = vmatpush2.msra.mxu0 0.0
        %739 = vmatprep.subr.mxu0 0.0
        %740 = vmatpush2.msra.mxu0 0.0
        %741 = vmatprep.subr.mxu0 0.0
        %742 = vmatpush2.msra.mxu0 0.0
        %743 = vmatprep.subr.mxu0 0.0
        %744 = vmatpush2.msra.mxu0 0.0
        %745 = vmatprep.subr.mxu0 0.0
        %746 = vmatpush2.msra.mxu0 0.0
        %747 = vmatprep.subr.mxu0 0.0
        %748 = vmatpush2.msra.mxu0 0.0
        %749 = vmatprep.subr.mxu0 0.0
        %750 = vmatpush2.msra.mxu0 0.0
        %751 = vmatprep.subr.mxu0 0.0
        %752 = vmatpush2.msra.mxu0 0.0
        %753 = vmatprep.subr.mxu0 0.0
        %754 = vmatpush2.msra.mxu0 0.0
        %755 = vmatprep.subr.mxu0 0.0
        %756 = vmatpush2.msra.mxu0 0.0
        %757 = vmatprep.mubr.f32.mxu0 0.0
        %758 = vmatmul.mubr.f32.gmra.mxu0 %v691
        %v759 = vpop.f32.mrf.mxu0
        %v760 = vadd.f32 0.0, %v759
        %v761 = vpop.f32.mrf.mxu0
        %762 = vdwg.mxu0
        %763 = vst.msk [vmem:[%s396] sm:$0xff] %vm594, %v615
        %764 = vst.msk [vmem:[%s396 + $0x8] sm:$0xff] %vm594, %v616
        %765 = vst.msk [vmem:[%s389] sm:$0xff] %vm435, %v687
        %766 = vst.msk [vmem:[%s389 + $0x8] sm:$0xff] %vm435, %v760
        %s767 = sand.u32 %s176, 1
        %s768 = scalar_lea.sflag [#allocation4], %s767
        %s769 = sand.u32 %s176, 1
        %s770 = smul.addr %s769, 16
        %s771 = scalar_lea.vmem [#allocation7], %s770
        %s772 = sand.u32 %s206, 1
        %s773 = scalar_lea.sflag [#allocation9], %s772
        %s774 = sand.u32 %s206, 1
        %s775 = smul.addr %s774, 16
        %s776 = scalar_lea.vmem [#allocation8], %s775
        // Predicated region
        $region45: #{tpu_custom_call.1} parent=35 // pred_check
          %p777 = pneg %p186
        $region46: #{tpu_custom_call.1} parent=35 // pred_check_branch
          %779 = sbr.rel (%p777) target = $region48
        $region47: #{tpu_custom_call.1} parent=35 // pred_region
          %s780 = smul.u32 2, %s35
          %s782 = ssub.s32 256, 256
          %783 = vsyncadd %s768, %s782
          %s784 = sadd.s32 %s36, %s780
          %s785 = smul.addr %s34, 2
          %s786 = sadd.s32 %s784, %s785
          %s787 = smul.addr %s786, 128
          %s788 = scalar_lea.hbm %s4, %s787
          %s789 = sshll.u32 %s771, 4
          %s790 = int_to_ptr.vmem [resolvable:$true] %s789
          %795 = dma.vmem_to_hbm [thread:$0]  %s790, 256, %s788, %s768, 128, 128, 8
        $region48: #{tpu_custom_call.1} parent=35 // pred_fallthru
          _
        // Predicated region
        $region49: #{tpu_custom_call.1} parent=35 // pred_check
          %p796 = pneg %p216
        $region50: #{tpu_custom_call.1} parent=35 // pred_check_branch
          %798 = sbr.rel (%p796) target = $region52
        $region51: #{tpu_custom_call.1} parent=35 // pred_region
          %s799 = smul.u32 2, %s35
          %s801 = ssub.s32 256, 256
          %802 = vsyncadd %s773, %s801
          %s803 = sadd.s32 %s36, %s799
          %s804 = smul.addr %s34, 2
          %s805 = sadd.s32 %s803, %s804
          %s806 = smul.addr %s805, 128
          %s807 = scalar_lea.hbm %s5, %s806
          %s808 = sshll.u32 %s776, 4
          %s809 = int_to_ptr.vmem [resolvable:$true] %s808
          %814 = dma.vmem_to_hbm [thread:$0]  %s809, 256, %s807, %s773, 128, 128, 8
        $region52: #{tpu_custom_call.1} parent=35 // pred_fallthru
          _
      $region36: #{tpu_custom_call.1} parent=5 // pred_fallthru
        _
      %p815 = scmp.le.s32.totalorder 2, %s24
      // Predicated region
      $region53: #{tpu_custom_call.1} parent=5 // pred_check
        %p816 = pneg %p815
      $region54: #{tpu_custom_call.1} parent=5 // pred_check_branch
        %818 = sbr.rel (%p816) target = $region56
      $region55: #{tpu_custom_call.1} parent=5 // pred_region
        %s819 = ssub.s32 %s24, 2
        // Predicated region
        $region57: #{tpu_custom_call.1} parent=55 // pred_check
          %p820 = pneg %p192
        $region58: #{tpu_custom_call.1} parent=55 // pred_check_branch
          %822 = sbr.rel (%p820) target = $region60
        $region59: #{tpu_custom_call.1} parent=55 // pred_region
          %s823 = sand.u32 %s177, 1
          %s824 = scalar_lea.sflag [#allocation4], %s823
          %s825 = sand.u32 %s177, 1
          %s826 = smul.addr %s825, 16
          %s827 = scalar_lea.vmem [#allocation7], %s826
          %828 = dma.done %s824, 256
        $region60: #{tpu_custom_call.1} parent=55 // pred_fallthru
          _
        // Predicated region
        $region61: #{tpu_custom_call.1} parent=55 // pred_check
          %p829 = pneg %p222
        $region62: #{tpu_custom_call.1} parent=55 // pred_check_branch
          %831 = sbr.rel (%p829) target = $region64
        $region63: #{tpu_custom_call.1} parent=55 // pred_region
          %s832 = sand.u32 %s207, 1
          %s833 = scalar_lea.sflag [#allocation9], %s832
          %s834 = sand.u32 %s207, 1
          %s835 = smul.addr %s834, 16
          %s836 = scalar_lea.vmem [#allocation8], %s835
          %837 = dma.done %s833, 256
        $region64: #{tpu_custom_call.1} parent=55 // pred_fallthru
          _
      $region56: #{tpu_custom_call.1} parent=5 // pred_fallthru
        _
    $region6: #{tpu_custom_call.1} parent=1 // loop_footer
      %s28 = sadd.s32 1, %s24
    $region7: #{tpu_custom_call.1} parent=1 // loop_footer_branch
      %23 = sbr.rel target = $region3
    $region8: #{tpu_custom_call.1} parent=1 // loop_exit
      _
    %838 = vsyncpa [#allocation3], 1
    %s839 = scalar_lea.sflag [#allocation3], 1
    %840 = vsyncpa %s839, 1
    %841 = vsyncpa [#allocation6], 1
    %s842 = scalar_lea.sflag [#allocation6], 1
    %843 = vsyncpa %s842, 1
    %844 = vsyncpa [#allocation4], 1
    %s845 = scalar_lea.sflag [#allocation4], 1
    %846 = vsyncpa %s845, 1
    %847 = vsyncpa [#allocation9], 1
    %s848 = scalar_lea.sflag [#allocation9], 1
    %849 = vsyncpa %s848, 1

</llo_original>
